<compile_context>
chip_gen: v6e
topology: v6e:2x2x1
jax: 0.10.0
libtpu: 0.0.40
codegen_flags: <defaults>
</compile_context>

<pallas_src>
import functools

import jax
import jax.numpy as jnp
from jax import lax
from jax.experimental import pallas as pl
from jax.experimental.pallas import tpu as pltpu


def _round_up(x, m):
    return (x + m - 1) // m * m


def _cdiv(a, b):
    return -(-a // b)


def _dot_sum_kernel(alpha_ref, bias_ref, v1_ref, v2_ref, o_ref, acc_ref,
                    *, d_total, td, gpc):
    """One (batch-tile i, feature-tile k) grid step.

    alpha_ref, bias_ref : (1, 1) f32 scalars in SMEM
    v1_ref, v2_ref      : (tb, td) input-dtype tiles in VMEM
    o_ref               : (1, tb) f32 lane-dense output tile (written at last k)
    acc_ref             : (tb, 128) f32 accumulator, persistent across k steps
    """
    k = pl.program_id(1)
    nk = pl.num_programs(1)

    n_groups = td // 128          # 128-lane column groups per feature tile
    n_chunks = n_groups // gpc    # groups are folded gpc-at-a-time into acc
    cw = 128 * gpc

    @pl.when(k == 0)
    def _():
        acc_ref[...] = jnp.zeros_like(acc_ref)

    # Static: number of valid columns in the *last* feature tile (0 -> full).
    rem = d_total % td

    def group_product(col0, valid_cols):
        a = v1_ref[:, col0:col0 + 128].astype(jnp.float32)
        b = v2_ref[:, col0:col0 + 128].astype(jnp.float32)
        p = a * b
        if valid_cols is not None:
            # Mask garbage columns of a partial trailing feature block
            # (partial block contents are undefined).
            col = col0 + lax.broadcasted_iota(jnp.int32, (1, 128), 1)
            p = jnp.where(col < valid_cols, p, 0.0)
        return p

    def accumulate(valid_cols):
        # Fully static walk over the feature tile: 128-lane-aligned static
        # slices -> pure VPU loads / muls / adds, no relayout, no MXU.
        for c in range(n_chunks):
            base = c * cw
            s = group_product(base, valid_cols)
            for g in range(1, gpc):
                s = s + group_product(base + g * 128, valid_cols)
            acc_ref[...] += s

    if rem != 0:
        @pl.when(k != nk - 1)
        def _():
            accumulate(None)

        @pl.when(k == nk - 1)
        def _():
            accumulate(rem)
    else:
        accumulate(None)

    @pl.when(k == nk - 1)
    def _():
        # Collapse (tb, 128) -> lane-dense (1, tb) with one tiny MXU pass.
        ones_row = jnp.ones((1, 128), jnp.float32)
        row_sums = lax.dot_general(
            ones_row, acc_ref[...],
            dimension_numbers=(((1,), (1,)), ((), ())),
            precision=lax.Precision.HIGHEST,
            preferred_element_type=jnp.float32)                # (1, tb)
        o_ref[...] = alpha_ref[0, 0] * row_sums + bias_ref[0, 0]


def _choose_tiles(B, D, itemsize):
    """Pick (tb, td, gpc): batch tile, feature tile, lane-groups per acc update."""
    try:
        vmem_cap = int(pltpu.get_tpu_info().vmem_capacity_bytes)
    except Exception:                                          # pragma: no cover
        vmem_cap = 64 * 1024 * 1024                            # conservative (v7x)

    # Batch tile.  B <= 128: one tile whose block dim equals the array dim
    # (no padding, no garbage rows).  B > 128: >= 2 lane-dense (multiple of
    # 128) tiles so the "parallel" batch axis can be split across v7x's two
    # TensorCores, capped at 512 rows per tile.
    if B <= 128:
        tb = B
    else:
        n_bt = max(2, _cdiv(B, 512))
        tb = _round_up(_cdiv(B, n_bt), 128)

    # Lane-groups folded into one accumulator update: amortizes the accumulator
    # read-modify-write and loop code for narrow batch tiles.
    d_r = _round_up(D, 128)
    gpc = max(1, 128 // max(8, _round_up(min(tb, 128), 8)))
    gpc = min(gpc, d_r // 128)
    cw = 128 * gpc

    # Feature tile: multi-MiB blocks amortize the ~0.35us per-grid-step
    # overhead; 2 inputs x 2 pipeline buffers stay well inside VMEM on every
    # generation; 64-chunk cap bounds the statically unrolled code size.
    target_bytes = 8 * 1024 * 1024                             # per input per block
    budget_bytes = min(vmem_cap // 2, 64 * 1024 * 1024) // 4   # 2 inputs x 2 buffers
    max_block_bytes = min(target_bytes, budget_bytes)
    td = max_block_bytes // (tb * itemsize)
    td = max(cw, td // cw * cw)
    td = min(td, 64 * cw)
    td = min(td, _round_up(d_r, cw))
    return tb, td, gpc


def top_level_model_forward(vec1, vec2, alpha, bias, *, _force_tiles=None):
    """alpha * (vec1 * vec2).sum(axis=1) + bias   (== _TopLevelModel.forward)."""
    vec1 = jnp.asarray(vec1)
    vec2 = jnp.asarray(vec2)
    if vec1.dtype != vec2.dtype:
        common = jnp.promote_types(vec1.dtype, vec2.dtype)
        vec1, vec2 = vec1.astype(common), vec2.astype(common)
    B, D = vec1.shape
    assert vec2.shape == (B, D), (vec1.shape, vec2.shape)
    itemsize = vec1.dtype.itemsize

    if _force_tiles is not None:
        tb, td, gpc = _force_tiles
    else:
        tb, td, gpc = _choose_tiles(B, D, itemsize)
    assert td % (128 * gpc) == 0 and tb >= 1

    grid_b = _cdiv(B, tb)
    grid_k = _cdiv(D, td)
    b_out = grid_b * tb

    alpha_s = jnp.asarray(alpha, jnp.float32).reshape(1, 1)
    bias_s = jnp.asarray(bias, jnp.float32).reshape(1, 1)

    kernel = functools.partial(_dot_sum_kernel, d_total=D, td=td, gpc=gpc)

    # VMEM actually used: 2 inputs x 2 pipeline buffers x tile + accumulator +
    # double-buffered (1, tb) output + compiler slack.
    vmem_needed = (2 * 2 * tb * td * itemsize
                   + tb * 128 * 4
                   + 2 * tb * 4
                   + (8 << 20))
    try:
        vmem_cap = int(pltpu.get_tpu_info().vmem_capacity_bytes)
    except Exception:                                          # pragma: no cover
        vmem_cap = 64 << 20
    vmem_limit = int(min(max(vmem_needed, 32 << 20), (vmem_cap * 9) // 10, 100 << 20))

    out = pl.pallas_call(
        kernel,
        out_shape=jax.ShapeDtypeStruct((1, b_out), jnp.float32),
        grid_spec=pltpu.PrefetchScalarGridSpec(
            num_scalar_prefetch=0,
            grid=(grid_b, grid_k),
            in_specs=[
                pl.BlockSpec(memory_space=pltpu.SMEM),               # alpha
                pl.BlockSpec(memory_space=pltpu.SMEM),               # bias
                pl.BlockSpec((tb, td), lambda i, k: (i, k)),         # vec1 tile
                pl.BlockSpec((tb, td), lambda i, k: (i, k)),         # vec2 tile
            ],
            out_specs=pl.BlockSpec((1, tb), lambda i, k: (0, i)),    # lane-dense
            scratch_shapes=[pltpu.VMEM((tb, 128), jnp.float32)],     # accumulator
        ),
        compiler_params=pltpu.CompilerParams(
            dimension_semantics=("parallel", "arbitrary"),
            vmem_limit_bytes=vmem_limit),
        cost_estimate=pl.CostEstimate(
            flops=2 * B * D,
            transcendentals=0,
            bytes_accessed=2 * B * D * itemsize + B * 4),
    )(alpha_s, bias_s, vec1, vec2)

    return out[0, :B]                                   # (B,) like torch .sum(dim=1)


if __name__ == "__main__":
    key = jax.random.PRNGKey(0)

    def reference(v1, v2, alpha, bias):
        return (jnp.asarray(alpha, jnp.float32)[0]
                * jnp.sum(v1.astype(jnp.float32) * v2.astype(jnp.float32), axis=1)
                + jnp.asarray(bias, jnp.float32)[0])

    # 1) Demo shape; parameters at their torch init values (alpha=1, bias=0).
    B, D = 8, 128
    k1, k2, k3, k4, k5, k6 = jax.random.split(key, 6)
    v1 = jax.random.normal(k1, (B, D), dtype=jnp.float32)
    v2 = jax.random.normal(k2, (B, D), dtype=jnp.float32)
    alpha0 = jnp.ones((1,), jnp.float32)
    bias0 = jnp.zeros((1,), jnp.float32)
    out = jax.block_until_ready(top_level_model_forward(v1, v2, alpha0, bias0))
    assert out.shape == (B,)
    assert jnp.allclose(out, reference(v1, v2, alpha0, bias0), atol=1e-4, rtol=1e-4)

    # 2) Ragged B / D (partial trailing blocks + in-kernel feature-tail mask),
    #    non-trivial alpha / bias.
    alpha1 = jnp.full((1,), 1.5, jnp.float32)
    bias1 = jnp.full((1,), -0.25, jnp.float32)
    B2, D2 = 10, 200
    v1b = jax.random.normal(k3, (B2, D2), dtype=jnp.float32)
    v2b = jax.random.normal(k4, (B2, D2), dtype=jnp.float32)
    out2 = jax.block_until_ready(top_level_model_forward(v1b, v2b, alpha1, bias1))
    assert out2.shape == (B2,)
    assert jnp.allclose(out2, reference(v1b, v2b, alpha1, bias1), atol=1e-4, rtol=1e-4)

    # 3) Force a multi-step feature grid to exercise accumulation across k and
    #    the masked last feature block.
    B3, D3 = 10, 300
    v1c = jax.random.normal(k5, (B3, D3), dtype=jnp.float32)
    v2c = jax.random.normal(k6, (B3, D3), dtype=jnp.float32)
    out3 = jax.block_until_ready(
        top_level_model_forward(v1c, v2c, alpha1, bias1, _force_tiles=(10, 128, 1)))
    assert out3.shape == (B3,)
    assert jnp.allclose(out3, reference(v1c, v2c, alpha1, bias1), atol=1e-4, rtol=1e-4)

    # 4) Force a multi-tile batch grid with a partial trailing batch block.
    B4, D4 = 260, 384
    k7, k8 = jax.random.split(k6)
    v1d = jax.random.normal(k7, (B4, D4), dtype=jnp.float32)
    v2d = jax.random.normal(k8, (B4, D4), dtype=jnp.float32)
    out4 = jax.block_until_ready(
        top_level_model_forward(v1d, v2d, alpha1, bias1, _force_tiles=(128, 128, 1)))
    assert out4.shape == (B4,)
    assert jnp.allclose(out4, reference(v1d, v2d, alpha1, bias1), atol=1e-4, rtol=1e-4)

    print("KERNEL_OK")
</pallas_src>

<mosaic_0001>
module attributes {stable_mosaic.version = 11 : i64} {
  func.func @_dot_sum_kernel(%arg0: i32, %arg1: i32, %arg2: memref<1x1xf32, #tpu.memory_space<smem>>, %arg3: memref<1x1xf32, #tpu.memory_space<smem>>, %arg4: memref<8x128xf32, #tpu.memory_space<vmem>>, %arg5: memref<8x128xf32, #tpu.memory_space<vmem>>, %arg6: memref<1x8xf32, #tpu.memory_space<vmem>>, %arg7: memref<8x128xf32, #tpu.memory_space<vmem>>) attributes {dimension_semantics = [#tpu.dimension_semantics<parallel>, #tpu.dimension_semantics<arbitrary>], iteration_bounds = array<i64: 1, 1>, scalar_prefetch = 0 : i64, scratch_operands = 1 : i64, tpu.core_type = #tpu.core_type<tc>, window_params = [{transform_indices = @transform_0, window_bounds = array<i64: 1, 1>}, {transform_indices = @transform_1, window_bounds = array<i64: 1, 1>}, {transform_indices = @transform_2, window_bounds = array<i64: 8, 128>}, {transform_indices = @transform_3, window_bounds = array<i64: 8, 128>}, {transform_indices = @transform_4, window_bounds = array<i64: 1, 8>}]} {
    %c0_i32 = arith.constant 0 : i32
    %0 = arith.cmpi eq, %arg1, %c0_i32 : i32
    %1 = arith.extui %0 : i1 to i32
    %c0_i32_0 = arith.constant 0 : i32
    %2 = arith.cmpi ne, %1, %c0_i32_0 : i32
    scf.if %2 {
      %cst = arith.constant 0.000000e+00 : f32
      %12 = vector.broadcast %cst : f32 to vector<8x128xf32>
      %c0_10 = arith.constant 0 : index
      %c0_11 = arith.constant 0 : index
      %13 = vector.load %arg7[%c0_10, %c0_11] : memref<8x128xf32, #tpu.memory_space<vmem>>, vector<8x128xf32>
      tpu.vector_store %arg7[%c0_10, %c0_11], %12 {strides = array<i32>} : memref<8x128xf32, #tpu.memory_space<vmem>>, vector<8x128xf32>,
    } else {
    }
    %c0 = arith.constant 0 : index
    %c0_1 = arith.constant 0 : index
    %3 = vector.load %arg4[%c0, %c0_1] : memref<8x128xf32, #tpu.memory_space<vmem>>, vector<8x128xf32>
    %c0_2 = arith.constant 0 : index
    %c0_3 = arith.constant 0 : index
    %4 = vector.load %arg5[%c0_2, %c0_3] : memref<8x128xf32, #tpu.memory_space<vmem>>, vector<8x128xf32>
    %5 = arith.mulf %3, %4 : vector<8x128xf32>
    %c0_4 = arith.constant 0 : index
    %c0_5 = arith.constant 0 : index
    %6 = vector.load %arg7[%c0_4, %c0_5] : memref<8x128xf32, #tpu.memory_space<vmem>>, vector<8x128xf32>
    %7 = arith.addf %6, %5 : vector<8x128xf32>
    %c0_6 = arith.constant 0 : index
    %c0_7 = arith.constant 0 : index
    %8 = vector.load %arg7[%c0_6, %c0_7] : memref<8x128xf32, #tpu.memory_space<vmem>>, vector<8x128xf32>
    tpu.vector_store %arg7[%c0_6, %c0_7], %7 {strides = array<i32>} : memref<8x128xf32, #tpu.memory_space<vmem>>, vector<8x128xf32>,
    %c0_i32_8 = arith.constant 0 : i32
    %9 = arith.cmpi eq, %arg1, %c0_i32_8 : i32
    %10 = arith.extui %9 : i1 to i32
    %c0_i32_9 = arith.constant 0 : i32
    %11 = arith.cmpi ne, %10, %c0_i32_9 : i32
    scf.if %11 {
      %cst = arith.constant 1.000000e+00 : f32
      %12 = vector.broadcast %cst : f32 to vector<1x128xf32>
      %c0_10 = arith.constant 0 : index
      %c0_11 = arith.constant 0 : index
      %13 = vector.load %arg7[%c0_10, %c0_11] : memref<8x128xf32, #tpu.memory_space<vmem>>, vector<8x128xf32>
      %cst_12 = arith.constant dense<0.000000e+00> : vector<1x8xf32>
      %14 = tpu.matmul %12, %13, %cst_12 {dimension_numbers = #tpu.dot_dimension_numbers<[1], [1], [0], [0], [0, 0, 1, 0], [], []>, precision = #tpu.contract_precision<fp32>} : vector<1x128xf32>, vector<8x128xf32>, vector<1x8xf32> -> vector<1x8xf32>
      %c0_13 = arith.constant 0 : index
      %c0_14 = arith.constant 0 : index
      %15 = memref.load %arg2[%c0_13, %c0_14] : memref<1x1xf32, #tpu.memory_space<smem>>
      %16 = vector.broadcast %15 : f32 to vector<1x8xf32>
      %17 = arith.mulf %16, %14 : vector<1x8xf32>
      %c0_15 = arith.constant 0 : index
      %c0_16 = arith.constant 0 : index
      %18 = memref.load %arg3[%c0_15, %c0_16] : memref<1x1xf32, #tpu.memory_space<smem>>
      %19 = vector.broadcast %18 : f32 to vector<1x8xf32>
      %20 = arith.addf %17, %19 : vector<1x8xf32>
      %c0_17 = arith.constant 0 : index
      %c0_18 = arith.constant 0 : index
      %21 = vector.load %arg6[%c0_17, %c0_18] : memref<1x8xf32, #tpu.memory_space<vmem>>, vector<1x8xf32>
      tpu.vector_store %arg6[%c0_17, %c0_18], %20 {strides = array<i32>} : memref<1x8xf32, #tpu.memory_space<vmem>>, vector<1x8xf32>,
    } else {
    }
    return
  }
  func.func @transform_0(%arg0: i32, %arg1: i32) -> (i32, i32) {
    %c0_i32 = arith.constant 0 : i32
    %c0_i32_0 = arith.constant 0 : i32
    %c0_i32_1 = arith.constant 0 : i32
    return %c0_i32, %c0_i32_0 : i32, i32
  }
  func.func @transform_1(%arg0: i32, %arg1: i32) -> (i32, i32) {
    %c0_i32 = arith.constant 0 : i32
    %c0_i32_0 = arith.constant 0 : i32
    %c0_i32_1 = arith.constant 0 : i32
    return %c0_i32, %c0_i32_0 : i32, i32
  }
  func.func @transform_2(%arg0: i32, %arg1: i32) -> (i32, i32) {
    %c0_i32 = arith.constant 0 : i32
    return %arg0, %arg1 : i32, i32
  }
  func.func @transform_3(%arg0: i32, %arg1: i32) -> (i32, i32) {
    %c0_i32 = arith.constant 0 : i32
    return %arg0, %arg1 : i32, i32
  }
  func.func @transform_4(%arg0: i32, %arg1: i32) -> (i32, i32) {
    %c0_i32 = arith.constant 0 : i32
    %c0_i32_0 = arith.constant 0 : i32
    return %c0_i32, %arg0 : i32, i32
  }
}

</mosaic_0001>

<llo_original>
// kernel: tpu_custom_call.1
$region0: #{tpu_custom_call.1}
  #allocation0 [shape = 'u32[]', space=smem, size = 0x4, offset = 0x4, fixed_abs, tag = 'smem constant byte address 0x4 - core index']
  #allocation1 [shape = 'u32[144,128]{1,0:T(1,128)}', space=vmem, size = 0x12000, scoped, tag = 'internal scratch']
  #allocation2 [shape = 'f32[8,128]{1,0:T(8,128)}', space=vmem, size = 0x1000, scoped, tag = 'scratch operand']
  #allocation3 [shape = 'f32[1,1]{1,0:T(1,128)S(6)}', space=smem, size = 0x200, scoped, tag = 'scoped memory for tpu_custom_call.1']
  #allocation4 [shape = 'f32[1,1]{1,0:T(1,128)S(6)}', space=smem, size = 0x200, scoped, tag = 'scoped memory for tpu_custom_call.1']
  %s0 = inlined_call_operand.<no memory space> [shape: f32[1,1], index: 0, kind: input, shape index: {}]
  %s1 = inlined_call_operand.<no memory space> [shape: f32[1,1], index: 1, kind: input, shape index: {}]
  %s2 = inlined_call_operand.hbm [shape: f32[8,128], index: 2, kind: input, shape index: {}]
  %s3 = inlined_call_operand.hbm [shape: f32[8,128], index: 3, kind: input, shape index: {}]
  %s4 = inlined_call_operand.hbm [shape: f32[1,8], index: 4, kind: output, shape index: {}]
  %s5 = sld [smem:[#allocation0]]
  $region42: #{tpu_custom_call.1} parent=0
    _
  %s7 = ssub.s32 1, %s5
  %s8 = scalar_select 0, %s7, %s5
  %9 = sst [smem:[#allocation3]] %s0
  %10 = sst [smem:[#allocation4]] %s1
  $region1: #{tpu_custom_call.1} parent=0
    #allocation5 [shape = 'u8[4096]{0}', space=vmem, size = 0x1000, scoped, tag = 'input window, operand 2, single buffered']
    #allocation6 [shape = 's32[1]{0}', space=sflag, size = 0x4, scoped, tag = 'scoped memory for tpu_custom_call.1']
    #allocation7 [shape = 's32[1]{0}', space=sflag, size = 0x4, scoped, tag = 'scoped memory for tpu_custom_call.1']
    #allocation8 [shape = 'u8[4096]{0}', space=vmem, size = 0x1000, scoped, tag = 'input window, operand 3, single buffered']
    #allocation9 [shape = 's32[1]{0}', space=sflag, size = 0x4, scoped, tag = 'scoped memory for tpu_custom_call.1']
    #allocation10 [shape = 'u8[512]{0}', space=vmem, size = 0x400, scoped, tag = 'output window, operand 0, single buffered']
    %11 = vsyncpa [#allocation6], 0
    %12 = vsyncpa [#allocation9], 0
    %13 = vsyncpa [#allocation7], 0
    // Predicated region
    $region2: #{tpu_custom_call.1} parent=1 // pred_check
      _
    $region3: #{tpu_custom_call.1} parent=1 // pred_check_branch
      %15 = sbr.rel (0) target = $region5
    $region4: #{tpu_custom_call.1} parent=1 // pred_region
      _
    $region5: #{tpu_custom_call.1} parent=1 // pred_fallthru
      _
    // Predicated region
    $region6: #{tpu_custom_call.1} parent=1 // pred_check
      _
    $region7: #{tpu_custom_call.1} parent=1 // pred_check_branch
      %17 = sbr.rel (0) target = $region9
    $region8: #{tpu_custom_call.1} parent=1 // pred_region
      _
    $region9: #{tpu_custom_call.1} parent=1 // pred_fallthru
      _
    // Predicated region
    $region10: #{tpu_custom_call.1} parent=1 // pred_check
      _
    $region11: #{tpu_custom_call.1} parent=1 // pred_check_branch
      %19 = sbr.rel (0) target = $region13
    $region12: #{tpu_custom_call.1} parent=1 // pred_region
      %s21 = ssub.s32 128, 128
      %22 = vsyncadd [#allocation6], %s21
      %s24 = sshll.u32 [#allocation5], 4
      %s25 = int_to_ptr.vmem [resolvable:$true] %s24
      %27 = dma.hbm_to_vmem [thread:$0]  %s2, 128, %s25, [#allocation6]
    $region13: #{tpu_custom_call.1} parent=1 // pred_fallthru
      _
    // Predicated region
    $region14: #{tpu_custom_call.1} parent=1 // pred_check
      _
    $region15: #{tpu_custom_call.1} parent=1 // pred_check_branch
      %29 = sbr.rel (0) target = $region17
    $region16: #{tpu_custom_call.1} parent=1 // pred_region
      %s31 = ssub.s32 128, 128
      %32 = vsyncadd [#allocation9], %s31
      %s34 = sshll.u32 [#allocation8], 4
      %s35 = int_to_ptr.vmem [resolvable:$true] %s34
      %37 = dma.hbm_to_vmem [thread:$0]  %s3, 128, %s35, [#allocation9]
    $region17: #{tpu_custom_call.1} parent=1 // pred_fallthru
      _
    // Predicated region
    $region18: #{tpu_custom_call.1} parent=1 // pred_check
      _
    $region19: #{tpu_custom_call.1} parent=1 // pred_check_branch
      %39 = sbr.rel (0) target = $region21
    $region20: #{tpu_custom_call.1} parent=1 // pred_region
      %40 = dma.done [#allocation6], 128
    $region21: #{tpu_custom_call.1} parent=1 // pred_fallthru
      _
    // Predicated region
    $region22: #{tpu_custom_call.1} parent=1 // pred_check
      _
    $region23: #{tpu_custom_call.1} parent=1 // pred_check_branch
      %42 = sbr.rel (0) target = $region25
    $region24: #{tpu_custom_call.1} parent=1 // pred_region
      %43 = dma.done [#allocation9], 128
    $region25: #{tpu_custom_call.1} parent=1 // pred_fallthru
      _
    %p44 = scmp.eq.s32.totalorder 0, 0
    // Predicated region
    $region26: #{tpu_custom_call.1} parent=1 // pred_check
      %p45 = pneg %p44
    $region27: #{tpu_custom_call.1} parent=1 // pred_check_branch
      %47 = sbr.rel (%p45) target = $region29
    $region28: #{tpu_custom_call.1} parent=1 // pred_region
      %48 = vst [vmem:[#allocation2] sm:$0xff] 0.0
    $region29: #{tpu_custom_call.1} parent=1 // pred_fallthru
      _
    %v49 = vld [vmem:[#allocation5] sm:$0xff]
    %v50 = vld [vmem:[#allocation8] sm:$0xff]
    %v51 = vmul.f32 %v49, %v50
    %v52 = vld [vmem:[#allocation2] sm:$0xff]
    %v53 = vadd.f32 %v52, %v51
    %54 = vst [vmem:[#allocation2] sm:$0xff] %v53
    // Predicated region
    $region30: #{tpu_custom_call.1} parent=1 // pred_check
      %p55 = pneg %p44
    $region31: #{tpu_custom_call.1} parent=1 // pred_check_branch
      %57 = sbr.rel (%p55) target = $region33
    $region32: #{tpu_custom_call.1} parent=1 // pred_region
      %v58 = vld [vmem:[#allocation2] sm:$0xff]
      %59 = vmatprep.subr.mxu0 0.0
      %60 = vmatpush1.xpose.msra.mxu0 0.0
      %61 = vmatprep.subr.mxu0 0.0
      %62 = vmatpush1.xpose.msra.mxu0 0.0
      %63 = vmatprep.subr.mxu0 0.0
      %64 = vmatpush1.xpose.msra.mxu0 0.0
      %65 = vmatprep.subr.mxu0 0.0
      %66 = vmatpush1.xpose.msra.mxu0 0.0
      %67 = vmatprep.subr.mxu0 0.0
      %68 = vmatpush1.xpose.msra.mxu0 0.0
      %69 = vmatprep.subr.mxu0 0.0
      %70 = vmatpush1.xpose.msra.mxu0 0.0
      %71 = vmatprep.subr.mxu0 0.0
      %72 = vmatpush1.xpose.msra.mxu0 0.0
      %73 = vmatprep.subr.mxu0 0.0
      %74 = vmatpush1.xpose.msra.mxu0 0.0
      %75 = vmatprep.subr.mxu0 0.0
      %76 = vmatpush1.xpose.msra.mxu0 0.0
      %77 = vmatprep.subr.mxu0 0.0
      %78 = vmatpush1.xpose.msra.mxu0 0.0
      %79 = vmatprep.subr.mxu0 0.0
      %80 = vmatpush1.xpose.msra.mxu0 0.0
      %81 = vmatprep.subr.mxu0 0.0
      %82 = vmatpush1.xpose.msra.mxu0 0.0
      %83 = vmatprep.subr.mxu0 0.0
      %84 = vmatpush1.xpose.msra.mxu0 0.0
      %85 = vmatprep.subr.mxu0 0.0
      %86 = vmatpush1.xpose.msra.mxu0 0.0
      %87 = vmatprep.subr.mxu0 0.0
      %88 = vmatpush1.xpose.msra.mxu0 0.0
      %89 = vmatprep.subr.mxu0 0.0
      %v90 = vand.u32 %v58, 4294901760
      %91 = vmatpush1.xpose.msra.mxu0 %v90
      %92 = vmatprep.subr.mxu0 0.0
      %93 = vmatpush2.xpose.msra.mxu0 0.0
      %94 = vmatprep.subr.mxu0 0.0
      %95 = vmatpush2.xpose.msra.mxu0 0.0
      %96 = vmatprep.subr.mxu0 0.0
      %97 = vmatpush2.xpose.msra.mxu0 0.0
      %98 = vmatprep.subr.mxu0 0.0
      %99 = vmatpush2.xpose.msra.mxu0 0.0
      %100 = vmatprep.subr.mxu0 0.0
      %101 = vmatpush2.xpose.msra.mxu0 0.0
      %102 = vmatprep.subr.mxu0 0.0
      %103 = vmatpush2.xpose.msra.mxu0 0.0
      %104 = vmatprep.subr.mxu0 0.0
      %105 = vmatpush2.xpose.msra.mxu0 0.0
      %106 = vmatprep.subr.mxu0 0.0
      %107 = vmatpush2.xpose.msra.mxu0 0.0
      %108 = vmatprep.subr.mxu0 0.0
      %109 = vmatpush2.xpose.msra.mxu0 0.0
      %110 = vmatprep.subr.mxu0 0.0
      %111 = vmatpush2.xpose.msra.mxu0 0.0
      %112 = vmatprep.subr.mxu0 0.0
      %113 = vmatpush2.xpose.msra.mxu0 0.0
      %114 = vmatprep.subr.mxu0 0.0
      %115 = vmatpush2.xpose.msra.mxu0 0.0
      %116 = vmatprep.subr.mxu0 0.0
      %117 = vmatpush2.xpose.msra.mxu0 0.0
      %118 = vmatprep.subr.mxu0 0.0
      %119 = vmatpush2.xpose.msra.mxu0 0.0
      %120 = vmatprep.subr.mxu0 0.0
      %121 = vmatpush2.xpose.msra.mxu0 0.0
      %122 = vmatprep.subr.mxu0 0.0
      %123 = vmatpush2.xpose.msra.mxu0 0.0
      %124 = vmatprep.mubr.f32.mxu0 0.0
      %125 = vmatmul.mubr.f32.gmra.mxu0 0.0
      %v126 = vpop.f32.mrf.mxu0
      %v127 = vadd.f32 0.0, %v126
      %v128 = vpop.f32.mrf.mxu0
      %129 = vdwg.mxu0
      %130 = vmatprep.subr.mxu0 0.0
      %131 = vmatpush1.xpose.msra.mxu0 0.0
      %132 = vmatprep.subr.mxu0 0.0
      %133 = vmatpush1.xpose.msra.mxu0 0.0
      %134 = vmatprep.subr.mxu0 0.0
      %135 = vmatpush1.xpose.msra.mxu0 0.0
      %136 = vmatprep.subr.mxu0 0.0
      %137 = vmatpush1.xpose.msra.mxu0 0.0
      %138 = vmatprep.subr.mxu0 0.0
      %139 = vmatpush1.xpose.msra.mxu0 0.0
      %140 = vmatprep.subr.mxu0 0.0
      %141 = vmatpush1.xpose.msra.mxu0 0.0
      %142 = vmatprep.subr.mxu0 0.0
      %143 = vmatpush1.xpose.msra.mxu0 0.0
      %144 = vmatprep.subr.mxu0 0.0
      %145 = vmatpush1.xpose.msra.mxu0 0.0
      %146 = vmatprep.subr.mxu0 0.0
      %147 = vmatpush1.xpose.msra.mxu0 0.0
      %148 = vmatprep.subr.mxu0 0.0
      %149 = vmatpush1.xpose.msra.mxu0 0.0
      %150 = vmatprep.subr.mxu0 0.0
      %151 = vmatpush1.xpose.msra.mxu0 0.0
      %152 = vmatprep.subr.mxu0 0.0
      %153 = vmatpush1.xpose.msra.mxu0 0.0
      %154 = vmatprep.subr.mxu0 0.0
      %155 = vmatpush1.xpose.msra.mxu0 0.0
      %156 = vmatprep.subr.mxu0 0.0
      %157 = vmatpush1.xpose.msra.mxu0 0.0
      %158 = vmatprep.subr.mxu0 0.0
      %159 = vmatpush1.xpose.msra.mxu0 0.0
      %160 = vmatprep.subr.mxu0 0.0
      %v161 = vand.u32 %v58, 4294901760
      %v162 = vsub.f32 %v58, %v161
      %v163 = vand.u32 %v162, 4294901760
      %v164 = vsub.f32 %v162, %v163
      %v165 = vand.u32 %v164, 4294901760
      %166 = vmatpush1.xpose.msra.mxu0 %v165
      %167 = vmatprep.subr.mxu0 0.0
      %168 = vmatpush2.xpose.msra.mxu0 0.0
      %169 = vmatprep.subr.mxu0 0.0
      %170 = vmatpush2.xpose.msra.mxu0 0.0
      %171 = vmatprep.subr.mxu0 0.0
      %172 = vmatpush2.xpose.msra.mxu0 0.0
      %173 = vmatprep.subr.mxu0 0.0
      %174 = vmatpush2.xpose.msra.mxu0 0.0
      %175 = vmatprep.subr.mxu0 0.0
      %176 = vmatpush2.xpose.msra.mxu0 0.0
      %177 = vmatprep.subr.mxu0 0.0
      %178 = vmatpush2.xpose.msra.mxu0 0.0
      %179 = vmatprep.subr.mxu0 0.0
      %180 = vmatpush2.xpose.msra.mxu0 0.0
      %181 = vmatprep.subr.mxu0 0.0
      %182 = vmatpush2.xpose.msra.mxu0 0.0
      %183 = vmatprep.subr.mxu0 0.0
      %184 = vmatpush2.xpose.msra.mxu0 0.0
      %185 = vmatprep.subr.mxu0 0.0
      %186 = vmatpush2.xpose.msra.mxu0 0.0
      %187 = vmatprep.subr.mxu0 0.0
      %188 = vmatpush2.xpose.msra.mxu0 0.0
      %189 = vmatprep.subr.mxu0 0.0
      %190 = vmatpush2.xpose.msra.mxu0 0.0
      %191 = vmatprep.subr.mxu0 0.0
      %192 = vmatpush2.xpose.msra.mxu0 0.0
      %193 = vmatprep.subr.mxu0 0.0
      %194 = vmatpush2.xpose.msra.mxu0 0.0
      %195 = vmatprep.subr.mxu0 0.0
      %196 = vmatpush2.xpose.msra.mxu0 0.0
      %197 = vmatprep.subr.mxu0 0.0
      %198 = vmatpush2.xpose.msra.mxu0 0.0
      %199 = vmatprep.mubr.f32.mxu0 0.0
      %200 = vmatmul.mubr.f32.gmra.mxu0 1.0
      %v201 = vpop.f32.mrf.mxu0
      %v202 = vadd.f32 %v127, %v201
      %v203 = vpop.f32.mrf.mxu0
      %204 = vdwg.mxu0
      %205 = vmatprep.subr.mxu0 0.0
      %206 = vmatpush1.xpose.msra.mxu0 0.0
      %207 = vmatprep.subr.mxu0 0.0
      %208 = vmatpush1.xpose.msra.mxu0 0.0
      %209 = vmatprep.subr.mxu0 0.0
      %210 = vmatpush1.xpose.msra.mxu0 0.0
      %211 = vmatprep.subr.mxu0 0.0
      %212 = vmatpush1.xpose.msra.mxu0 0.0
      %213 = vmatprep.subr.mxu0 0.0
      %214 = vmatpush1.xpose.msra.mxu0 0.0
      %215 = vmatprep.subr.mxu0 0.0
      %216 = vmatpush1.xpose.msra.mxu0 0.0
      %217 = vmatprep.subr.mxu0 0.0
      %218 = vmatpush1.xpose.msra.mxu0 0.0
      %219 = vmatprep.subr.mxu0 0.0
      %220 = vmatpush1.xpose.msra.mxu0 0.0
      %221 = vmatprep.subr.mxu0 0.0
      %222 = vmatpush1.xpose.msra.mxu0 0.0
      %223 = vmatprep.subr.mxu0 0.0
      %224 = vmatpush1.xpose.msra.mxu0 0.0
      %225 = vmatprep.subr.mxu0 0.0
      %226 = vmatpush1.xpose.msra.mxu0 0.0
      %227 = vmatprep.subr.mxu0 0.0
      %228 = vmatpush1.xpose.msra.mxu0 0.0
      %229 = vmatprep.subr.mxu0 0.0
      %230 = vmatpush1.xpose.msra.mxu0 0.0
      %231 = vmatprep.subr.mxu0 0.0
      %232 = vmatpush1.xpose.msra.mxu0 0.0
      %233 = vmatprep.subr.mxu0 0.0
      %234 = vmatpush1.xpose.msra.mxu0 0.0
      %235 = vmatprep.subr.mxu0 0.0
      %v236 = vand.u32 %v58, 4294901760
      %v237 = vsub.f32 %v58, %v236
      %238 = vmatpush1.xpose.msra.mxu0 %v237
      %239 = vmatprep.subr.mxu0 0.0
      %240 = vmatpush2.xpose.msra.mxu0 0.0
      %241 = vmatprep.subr.mxu0 0.0
      %242 = vmatpush2.xpose.msra.mxu0 0.0
      %243 = vmatprep.subr.mxu0 0.0
      %244 = vmatpush2.xpose.msra.mxu0 0.0
      %245 = vmatprep.subr.mxu0 0.0
      %246 = vmatpush2.xpose.msra.mxu0 0.0
      %247 = vmatprep.subr.mxu0 0.0
      %248 = vmatpush2.xpose.msra.mxu0 0.0
      %249 = vmatprep.subr.mxu0 0.0
      %250 = vmatpush2.xpose.msra.mxu0 0.0
      %251 = vmatprep.subr.mxu0 0.0
      %252 = vmatpush2.xpose.msra.mxu0 0.0
      %253 = vmatprep.subr.mxu0 0.0
      %254 = vmatpush2.xpose.msra.mxu0 0.0
      %255 = vmatprep.subr.mxu0 0.0
      %256 = vmatpush2.xpose.msra.mxu0 0.0
      %257 = vmatprep.subr.mxu0 0.0
      %258 = vmatpush2.xpose.msra.mxu0 0.0
      %259 = vmatprep.subr.mxu0 0.0
      %260 = vmatpush2.xpose.msra.mxu0 0.0
      %261 = vmatprep.subr.mxu0 0.0
      %262 = vmatpush2.xpose.msra.mxu0 0.0
      %263 = vmatprep.subr.mxu0 0.0
      %264 = vmatpush2.xpose.msra.mxu0 0.0
      %265 = vmatprep.subr.mxu0 0.0
      %266 = vmatpush2.xpose.msra.mxu0 0.0
      %267 = vmatprep.subr.mxu0 0.0
      %268 = vmatpush2.xpose.msra.mxu0 0.0
      %269 = vmatprep.subr.mxu0 0.0
      %270 = vmatpush2.xpose.msra.mxu0 0.0
      %271 = vmatprep.mubr.f32.mxu0 0.0
      %272 = vmatmul.mubr.f32.gmra.mxu0 0.0
      %v273 = vpop.f32.mrf.mxu0
      %v274 = vadd.f32 %v202, %v273
      %v275 = vpop.f32.mrf.mxu0
      %276 = vdwg.mxu0
      %277 = vmatprep.subr.mxu0 0.0
      %278 = vmatpush1.xpose.msra.mxu0 0.0
      %279 = vmatprep.subr.mxu0 0.0
      %280 = vmatpush1.xpose.msra.mxu0 0.0
      %281 = vmatprep.subr.mxu0 0.0
      %282 = vmatpush1.xpose.msra.mxu0 0.0
      %283 = vmatprep.subr.mxu0 0.0
      %284 = vmatpush1.xpose.msra.mxu0 0.0
      %285 = vmatprep.subr.mxu0 0.0
      %286 = vmatpush1.xpose.msra.mxu0 0.0
      %287 = vmatprep.subr.mxu0 0.0
      %288 = vmatpush1.xpose.msra.mxu0 0.0
      %289 = vmatprep.subr.mxu0 0.0
      %290 = vmatpush1.xpose.msra.mxu0 0.0
      %291 = vmatprep.subr.mxu0 0.0
      %292 = vmatpush1.xpose.msra.mxu0 0.0
      %293 = vmatprep.subr.mxu0 0.0
      %294 = vmatpush1.xpose.msra.mxu0 0.0
      %295 = vmatprep.subr.mxu0 0.0
      %296 = vmatpush1.xpose.msra.mxu0 0.0
      %297 = vmatprep.subr.mxu0 0.0
      %298 = vmatpush1.xpose.msra.mxu0 0.0
      %299 = vmatprep.subr.mxu0 0.0
      %300 = vmatpush1.xpose.msra.mxu0 0.0
      %301 = vmatprep.subr.mxu0 0.0
      %302 = vmatpush1.xpose.msra.mxu0 0.0
      %303 = vmatprep.subr.mxu0 0.0
      %304 = vmatpush1.xpose.msra.mxu0 0.0
      %305 = vmatprep.subr.mxu0 0.0
      %306 = vmatpush1.xpose.msra.mxu0 0.0
      %307 = vmatprep.subr.mxu0 0.0
      %v308 = vand.u32 %v58, 4294901760
      %309 = vmatpush1.xpose.msra.mxu0 %v308
      %310 = vmatprep.subr.mxu0 0.0
      %311 = vmatpush2.xpose.msra.mxu0 0.0
      %312 = vmatprep.subr.mxu0 0.0
      %313 = vmatpush2.xpose.msra.mxu0 0.0
      %314 = vmatprep.subr.mxu0 0.0
      %315 = vmatpush2.xpose.msra.mxu0 0.0
      %316 = vmatprep.subr.mxu0 0.0
      %317 = vmatpush2.xpose.msra.mxu0 0.0
      %318 = vmatprep.subr.mxu0 0.0
      %319 = vmatpush2.xpose.msra.mxu0 0.0
      %320 = vmatprep.subr.mxu0 0.0
      %321 = vmatpush2.xpose.msra.mxu0 0.0
      %322 = vmatprep.subr.mxu0 0.0
      %323 = vmatpush2.xpose.msra.mxu0 0.0
      %324 = vmatprep.subr.mxu0 0.0
      %325 = vmatpush2.xpose.msra.mxu0 0.0
      %326 = vmatprep.subr.mxu0 0.0
      %327 = vmatpush2.xpose.msra.mxu0 0.0
      %328 = vmatprep.subr.mxu0 0.0
      %329 = vmatpush2.xpose.msra.mxu0 0.0
      %330 = vmatprep.subr.mxu0 0.0
      %331 = vmatpush2.xpose.msra.mxu0 0.0
      %332 = vmatprep.subr.mxu0 0.0
      %333 = vmatpush2.xpose.msra.mxu0 0.0
      %334 = vmatprep.subr.mxu0 0.0
      %335 = vmatpush2.xpose.msra.mxu0 0.0
      %336 = vmatprep.subr.mxu0 0.0
      %337 = vmatpush2.xpose.msra.mxu0 0.0
      %338 = vmatprep.subr.mxu0 0.0
      %339 = vmatpush2.xpose.msra.mxu0 0.0
      %340 = vmatprep.subr.mxu0 0.0
      %341 = vmatpush2.xpose.msra.mxu0 0.0
      %342 = vmatprep.mubr.f32.mxu0 0.0
      %343 = vmatmul.mubr.f32.gmra.mxu0 0.0
      %v344 = vpop.f32.mrf.mxu0
      %v345 = vadd.f32 %v274, %v344
      %v346 = vpop.f32.mrf.mxu0
      %347 = vdwg.mxu0
      %348 = vmatprep.subr.mxu0 0.0
      %349 = vmatpush1.xpose.msra.mxu0 0.0
      %350 = vmatprep.subr.mxu0 0.0
      %351 = vmatpush1.xpose.msra.mxu0 0.0
      %352 = vmatprep.subr.mxu0 0.0
      %353 = vmatpush1.xpose.msra.mxu0 0.0
      %354 = vmatprep.subr.mxu0 0.0
      %355 = vmatpush1.xpose.msra.mxu0 0.0
      %356 = vmatprep.subr.mxu0 0.0
      %357 = vmatpush1.xpose.msra.mxu0 0.0
      %358 = vmatprep.subr.mxu0 0.0
      %359 = vmatpush1.xpose.msra.mxu0 0.0
      %360 = vmatprep.subr.mxu0 0.0
      %361 = vmatpush1.xpose.msra.mxu0 0.0
      %362 = vmatprep.subr.mxu0 0.0
      %363 = vmatpush1.xpose.msra.mxu0 0.0
      %364 = vmatprep.subr.mxu0 0.0
      %365 = vmatpush1.xpose.msra.mxu0 0.0
      %366 = vmatprep.subr.mxu0 0.0
      %367 = vmatpush1.xpose.msra.mxu0 0.0
      %368 = vmatprep.subr.mxu0 0.0
      %369 = vmatpush1.xpose.msra.mxu0 0.0
      %370 = vmatprep.subr.mxu0 0.0
      %371 = vmatpush1.xpose.msra.mxu0 0.0
      %372 = vmatprep.subr.mxu0 0.0
      %373 = vmatpush1.xpose.msra.mxu0 0.0
      %374 = vmatprep.subr.mxu0 0.0
      %375 = vmatpush1.xpose.msra.mxu0 0.0
      %376 = vmatprep.subr.mxu0 0.0
      %377 = vmatpush1.xpose.msra.mxu0 0.0
      %378 = vmatprep.subr.mxu0 0.0
      %v379 = vand.u32 %v58, 4294901760
      %v380 = vsub.f32 %v58, %v379
      %v381 = vand.u32 %v380, 4294901760
      %382 = vmatpush1.xpose.msra.mxu0 %v381
      %383 = vmatprep.subr.mxu0 0.0
      %384 = vmatpush2.xpose.msra.mxu0 0.0
      %385 = vmatprep.subr.mxu0 0.0
      %386 = vmatpush2.xpose.msra.mxu0 0.0
      %387 = vmatprep.subr.mxu0 0.0
      %388 = vmatpush2.xpose.msra.mxu0 0.0
      %389 = vmatprep.subr.mxu0 0.0
      %390 = vmatpush2.xpose.msra.mxu0 0.0
      %391 = vmatprep.subr.mxu0 0.0
      %392 = vmatpush2.xpose.msra.mxu0 0.0
      %393 = vmatprep.subr.mxu0 0.0
      %394 = vmatpush2.xpose.msra.mxu0 0.0
      %395 = vmatprep.subr.mxu0 0.0
      %396 = vmatpush2.xpose.msra.mxu0 0.0
      %397 = vmatprep.subr.mxu0 0.0
      %398 = vmatpush2.xpose.msra.mxu0 0.0
      %399 = vmatprep.subr.mxu0 0.0
      %400 = vmatpush2.xpose.msra.mxu0 0.0
      %401 = vmatprep.subr.mxu0 0.0
      %402 = vmatpush2.xpose.msra.mxu0 0.0
      %403 = vmatprep.subr.mxu0 0.0
      %404 = vmatpush2.xpose.msra.mxu0 0.0
      %405 = vmatprep.subr.mxu0 0.0
      %406 = vmatpush2.xpose.msra.mxu0 0.0
      %407 = vmatprep.subr.mxu0 0.0
      %408 = vmatpush2.xpose.msra.mxu0 0.0
      %409 = vmatprep.subr.mxu0 0.0
      %410 = vmatpush2.xpose.msra.mxu0 0.0
      %411 = vmatprep.subr.mxu0 0.0
      %412 = vmatpush2.xpose.msra.mxu0 0.0
      %413 = vmatprep.subr.mxu0 0.0
      %414 = vmatpush2.xpose.msra.mxu0 0.0
      %415 = vmatprep.mubr.f32.mxu0 0.0
      %416 = vmatmul.mubr.f32.gmra.mxu0 1.0
      %v417 = vpop.f32.mrf.mxu0
      %v418 = vadd.f32 %v345, %v417
      %v419 = vpop.f32.mrf.mxu0
      %420 = vdwg.mxu0
      %421 = vmatprep.subr.mxu0 0.0
      %422 = vmatpush1.xpose.msra.mxu0 0.0
      %423 = vmatprep.subr.mxu0 0.0
      %424 = vmatpush1.xpose.msra.mxu0 0.0
      %425 = vmatprep.subr.mxu0 0.0
      %426 = vmatpush1.xpose.msra.mxu0 0.0
      %427 = vmatprep.subr.mxu0 0.0
      %428 = vmatpush1.xpose.msra.mxu0 0.0
      %429 = vmatprep.subr.mxu0 0.0
      %430 = vmatpush1.xpose.msra.mxu0 0.0
      %431 = vmatprep.subr.mxu0 0.0
      %432 = vmatpush1.xpose.msra.mxu0 0.0
      %433 = vmatprep.subr.mxu0 0.0
      %434 = vmatpush1.xpose.msra.mxu0 0.0
      %435 = vmatprep.subr.mxu0 0.0
      %436 = vmatpush1.xpose.msra.mxu0 0.0
      %437 = vmatprep.subr.mxu0 0.0
      %438 = vmatpush1.xpose.msra.mxu0 0.0
      %439 = vmatprep.subr.mxu0 0.0
      %440 = vmatpush1.xpose.msra.mxu0 0.0
      %441 = vmatprep.subr.mxu0 0.0
      %442 = vmatpush1.xpose.msra.mxu0 0.0
      %443 = vmatprep.subr.mxu0 0.0
      %444 = vmatpush1.xpose.msra.mxu0 0.0
      %445 = vmatprep.subr.mxu0 0.0
      %446 = vmatpush1.xpose.msra.mxu0 0.0
      %447 = vmatprep.subr.mxu0 0.0
      %448 = vmatpush1.xpose.msra.mxu0 0.0
      %449 = vmatprep.subr.mxu0 0.0
      %450 = vmatpush1.xpose.msra.mxu0 0.0
      %451 = vmatprep.subr.mxu0 0.0
      %v452 = vand.u32 %v58, 4294901760
      %453 = vmatpush1.xpose.msra.mxu0 %v452
      %454 = vmatprep.subr.mxu0 0.0
      %455 = vmatpush2.xpose.msra.mxu0 0.0
      %456 = vmatprep.subr.mxu0 0.0
      %457 = vmatpush2.xpose.msra.mxu0 0.0
      %458 = vmatprep.subr.mxu0 0.0
      %459 = vmatpush2.xpose.msra.mxu0 0.0
      %460 = vmatprep.subr.mxu0 0.0
      %461 = vmatpush2.xpose.msra.mxu0 0.0
      %462 = vmatprep.subr.mxu0 0.0
      %463 = vmatpush2.xpose.msra.mxu0 0.0
      %464 = vmatprep.subr.mxu0 0.0
      %465 = vmatpush2.xpose.msra.mxu0 0.0
      %466 = vmatprep.subr.mxu0 0.0
      %467 = vmatpush2.xpose.msra.mxu0 0.0
      %468 = vmatprep.subr.mxu0 0.0
      %469 = vmatpush2.xpose.msra.mxu0 0.0
      %470 = vmatprep.subr.mxu0 0.0
      %471 = vmatpush2.xpose.msra.mxu0 0.0
      %472 = vmatprep.subr.mxu0 0.0
      %473 = vmatpush2.xpose.msra.mxu0 0.0
      %474 = vmatprep.subr.mxu0 0.0
      %475 = vmatpush2.xpose.msra.mxu0 0.0
      %476 = vmatprep.subr.mxu0 0.0
      %477 = vmatpush2.xpose.msra.mxu0 0.0
      %478 = vmatprep.subr.mxu0 0.0
      %479 = vmatpush2.xpose.msra.mxu0 0.0
      %480 = vmatprep.subr.mxu0 0.0
      %481 = vmatpush2.xpose.msra.mxu0 0.0
      %482 = vmatprep.subr.mxu0 0.0
      %483 = vmatpush2.xpose.msra.mxu0 0.0
      %484 = vmatprep.subr.mxu0 0.0
      %485 = vmatpush2.xpose.msra.mxu0 0.0
      %486 = vmatprep.mubr.f32.mxu0 0.0
      %487 = vmatmul.mubr.f32.gmra.mxu0 1.0
      %v488 = vpop.f32.mrf.mxu0
      %v489 = vadd.f32 %v418, %v488
      %v490 = vpop.f32.mrf.mxu0
      %491 = vdwg.mxu0
      %s492 = sld [smem:[#allocation3]]
      %v493 = vstv %s492
      %v494 = vmul.f32 %v493, %v489
      %s495 = sld [smem:[#allocation4]]
      %v496 = vstv %s495
      %v497 = vadd.f32 %v494, %v496
      %vm498 = vcmask 57344
      %499 = vst.msk [vmem:[#allocation10] sm:$0x1] %vm498, %v497
    $region33: #{tpu_custom_call.1} parent=1 // pred_fallthru
      _
    // Predicated region
    $region34: #{tpu_custom_call.1} parent=1 // pred_check
      _
    $region35: #{tpu_custom_call.1} parent=1 // pred_check_branch
      %501 = sbr.rel (0) target = $region37
    $region36: #{tpu_custom_call.1} parent=1 // pred_region
      %s503 = ssub.s32 16, 16
      %504 = vsyncadd [#allocation7], %s503
      %s506 = sshll.u32 [#allocation10], 4
      %s507 = int_to_ptr.vmem [resolvable:$true] %s506
      %509 = dma.vmem_to_hbm [thread:$0]  %s507, 16, %s4, [#allocation7]
    $region37: #{tpu_custom_call.1} parent=1 // pred_fallthru
      _
    // Predicated region
    $region38: #{tpu_custom_call.1} parent=1 // pred_check
      _
    $region39: #{tpu_custom_call.1} parent=1 // pred_check_branch
      %511 = sbr.rel (0) target = $region41
    $region40: #{tpu_custom_call.1} parent=1 // pred_region
      %512 = dma.done [#allocation7], 16
    $region41: #{tpu_custom_call.1} parent=1 // pred_fallthru
      _
    %513 = vsyncpa [#allocation6], 1
    %514 = vsyncpa [#allocation9], 1
    %515 = vsyncpa [#allocation7], 1

</llo_original>
